<compile_context>
chip_gen: v7x
topology: tpu7x:2x2x1
jax: 0.10.0
libtpu: 0.0.40
codegen_flags: <defaults>
</compile_context>

<pallas_src>
import math

import jax
import jax.numpy as jnp
import numpy as np
from jax.experimental import pallas as pl
from jax.experimental.pallas import tpu as pltpu


def _rope_kernel(t_ref, inv_ref, o_ref):
    # t_ref:   (1, TR)    coordinates for TR points (lane-major)
    # inv_ref: (1, dim)   concat(inv_freq, inv_freq) * (scale / min_freq)
    # o_ref:   (TR, dim)  rotary frequencies for these TR points
    tr = o_ref.shape[0]
    t_col = t_ref[...].reshape(tr, 1)          # point axis -> sublanes
    o_ref[...] = t_col * inv_ref[...]          # broadcast multiply on the VPU


def make_rotary_embedding(dim, min_freq=1.0 / 2, scale=1.0, block_rows=8192):
    """Build a callable equivalent to RotaryEmbedding(dim, min_freq, scale).forward."""
    assert dim % 2 == 0, "rotary dim must be even"
    assert block_rows % 128 == 0, "block_rows must be a multiple of 128"

    # Deterministic buffer init, exactly as in the PyTorch __init__.
    inv_freq = 1.0 / (10000.0 ** (np.arange(0, dim, 2, dtype=np.float32) / np.float32(dim)))
    # Fold torch.cat((freqs, freqs), -1) and the coordinate scale into one
    # (1, dim) constant (t*f)*inv == t*(f*inv).
    inv_cat = np.concatenate([inv_freq, inv_freq]).astype(np.float32) * np.float32(scale / min_freq)
    inv_cat = jnp.asarray(inv_cat).reshape(1, dim)

    @jax.jit
    def apply(coordinates):
        coordinates = coordinates.astype(jnp.float32)
        lead_shape = coordinates.shape           # '...i' -> arbitrary leading dims
        rows = int(math.prod(lead_shape))
        tr = block_rows if rows >= block_rows else rows
        grid = (pl.cdiv(rows, tr),)

        out = pl.pallas_call(
            _rope_kernel,
            out_shape=jax.ShapeDtypeStruct((rows, dim), jnp.float32),
            grid=grid,
            in_specs=[
                pl.BlockSpec((1, tr), lambda i: (0, i)),      # coords, lane-major
                pl.BlockSpec((1, dim), lambda i: (0, 0)),     # folded inv_freq constant
            ],
            out_specs=pl.BlockSpec((tr, dim), lambda i: (i, 0)),
            compiler_params=pltpu.CompilerParams(
                dimension_semantics=("parallel",),
                vmem_limit_bytes=32 * 1024 * 1024,
            ),
        )(coordinates.reshape(1, rows), inv_cat)

        return out.reshape(*lead_shape, dim)

    return apply, inv_freq


def reference_rope(coordinates, inv_freq, min_freq=1.0 / 2, scale=1.0):
    """Pure-numpy reference mirroring the PyTorch forward exactly."""
    t = np.asarray(coordinates, dtype=np.float32) * np.float32(scale / min_freq)
    freqs = np.einsum('...i,j->...ij', t, np.asarray(inv_freq, dtype=np.float32))
    return np.concatenate([freqs, freqs], axis=-1)


if __name__ == "__main__":
    dim = 32          # rotary feature dim
    batch = 2
    n_points = 8

    key = jax.random.PRNGKey(0)
    coords = jax.random.uniform(key, (batch, n_points), dtype=jnp.float32)

    rope, inv_freq_np = make_rotary_embedding(dim, min_freq=1.0 / 2, scale=1.0)
    out = jax.block_until_ready(rope(coords))
    ref = reference_rope(np.asarray(coords), inv_freq_np, min_freq=1.0 / 2, scale=1.0)
    np.testing.assert_allclose(np.asarray(out), ref, rtol=1e-5, atol=1e-6)

    # Also exercise the tiled, multi-step pipeline (incl. a ragged final block).
    rope_tiled, _ = make_rotary_embedding(dim, min_freq=1.0 / 2, scale=1.0, block_rows=256)
    coords2 = jax.random.uniform(jax.random.PRNGKey(0), (2, 520), dtype=jnp.float32)
    out2 = jax.block_until_ready(rope_tiled(coords2))
    ref2 = reference_rope(np.asarray(coords2), inv_freq_np, min_freq=1.0 / 2, scale=1.0)
    np.testing.assert_allclose(np.asarray(out2), ref2, rtol=1e-5, atol=1e-6)

    print("KERNEL_OK")
</pallas_src>

<mosaic_0001>
module attributes {stable_mosaic.version = 11 : i64} {
  func.func @_rope_kernel(%arg0: i32, %arg1: memref<1x16xf32, #tpu.memory_space<vmem>>, %arg2: memref<1x32xf32, #tpu.memory_space<vmem>>, %arg3: memref<16x32xf32, #tpu.memory_space<vmem>>) attributes {dimension_semantics = [#tpu.dimension_semantics<parallel>], iteration_bounds = array<i64: 1>, scalar_prefetch = 0 : i64, scratch_operands = 0 : i64, tpu.core_type = #tpu.core_type<tc>, window_params = [{transform_indices = @transform_0, window_bounds = array<i64: 1, 16>}, {pipeline_mode = #tpu.pipeline_mode<synchronous>, transform_indices = @transform_1, window_bounds = array<i64: 1, 32>}, {transform_indices = @transform_2, window_bounds = array<i64: 16, 32>}]} {
    %c0 = arith.constant 0 : index
    %c0_0 = arith.constant 0 : index
    %0 = vector.load %arg1[%c0, %c0_0] : memref<1x16xf32, #tpu.memory_space<vmem>>, vector<1x16xf32>
    %1 = vector.shape_cast %0 : vector<1x16xf32> to vector<16x1xf32>
    %c0_1 = arith.constant 0 : index
    %c0_2 = arith.constant 0 : index
    %2 = vector.load %arg2[%c0_1, %c0_2] : memref<1x32xf32, #tpu.memory_space<vmem>>, vector<1x32xf32>
    %3 = vector.broadcast %1 : vector<16x1xf32> to vector<16x32xf32>
    %4 = vector.broadcast %2 : vector<1x32xf32> to vector<16x32xf32>
    %5 = arith.mulf %3, %4 : vector<16x32xf32>
    %c0_3 = arith.constant 0 : index
    %c0_4 = arith.constant 0 : index
    %6 = vector.load %arg3[%c0_3, %c0_4] : memref<16x32xf32, #tpu.memory_space<vmem>>, vector<16x32xf32>
    tpu.vector_store %arg3[%c0_3, %c0_4], %5 {strides = array<i32>} : memref<16x32xf32, #tpu.memory_space<vmem>>, vector<16x32xf32>,
    return
  }
  func.func @transform_0(%arg0: i32) -> (i32, i32) {
    %c0_i32 = arith.constant 0 : i32
    %c0_i32_0 = arith.constant 0 : i32
    return %c0_i32, %arg0 : i32, i32
  }
  func.func @transform_1(%arg0: i32) -> (i32, i32) {
    %c0_i32 = arith.constant 0 : i32
    %c0_i32_0 = arith.constant 0 : i32
    %c0_i32_1 = arith.constant 0 : i32
    return %c0_i32, %c0_i32_0 : i32, i32
  }
  func.func @transform_2(%arg0: i32) -> (i32, i32) {
    %c0_i32 = arith.constant 0 : i32
    %c0_i32_0 = arith.constant 0 : i32
    return %arg0, %c0_i32 : i32, i32
  }
}

</mosaic_0001>

<llo_original>
// kernel: apply.1
$region0: #{apply.1}
  #allocation0 [shape = 'u32[]', space=smem, size = 0x4, offset = 0x4, fixed_abs, tag = 'smem constant byte address 0x4 - core index']
  #allocation1 [shape = 'u32[144,128]{1,0:T(1,128)}', space=vmem, size = 0x12000, scoped, tag = 'internal scratch']
  %s0 = inlined_call_operand.vmem [shape: f32[1,16], index: 0, kind: input, shape index: {}]
  %s1 = inlined_call_operand.vmem [shape: f32[1,32], index: 1, kind: input, shape index: {}]
  %s2 = inlined_call_operand.hbm [shape: f32[16,32], index: 2, kind: output, shape index: {}]
  %s3 = sld [smem:[#allocation0]]
  $region18: #{apply.1} parent=0
    _
  %s5 = ssub.s32 1, %s3
  %s6 = scalar_select 0, %s5, %s3
  $region1: #{apply.1} parent=0
    #allocation2 [shape = 'u8[8192]{0}', space=vmem, size = 0x2000, scoped, tag = 'output window, operand 0, single buffered']
    #allocation3 [shape = 's32[1]{0}', space=sflag, size = 0x4, scoped, tag = 'scoped memory for apply.1']
    %7 = vsyncpa [#allocation3], 0
    // Predicated region
    $region2: #{apply.1} parent=1 // pred_check
      _
    $region3: #{apply.1} parent=1 // pred_check_branch
      %9 = sbr.rel (0) target = $region5
    $region4: #{apply.1} parent=1 // pred_region
      _
    $region5: #{apply.1} parent=1 // pred_fallthru
      _
    // Predicated region
    $region6: #{apply.1} parent=1 // pred_check
      _
    $region7: #{apply.1} parent=1 // pred_check_branch
      %11 = sbr.rel (0) target = $region9
    $region8: #{apply.1} parent=1 // pred_region
      _
    $region9: #{apply.1} parent=1 // pred_fallthru
      _
    %v12 = vld [vmem:[%s0] sm:$0x1]
    %v13 = vlaneseq
    %v14 = vshrl.u32 %v13, 7
    %v15 = vsub.s32 0, %v14
    %v16 = vrot.slane %v12, %v15
    %18 = vbcast.lane.b32.xlu0 %v16, 256
    %v19 = vpop.permute.xlu0 %18
    %s21 = sor.u32 256, 8
    %22 = vbcast.lane.b32.xlu0 %v16, %s21
    %v23 = vpop.permute.xlu0 %22
    %v24 = vld [vmem:[%s1] sm:$0x1]
    %v26 = vlaneseq
    %v27 = vshrl.u32 %v26, 7
    %v28 = vsub.s32 0, %v27
    %v29 = vrot.slane %v24, %v28
    %v31 = vmul.f32 %v19, %v29
    %v32 = vmul.f32 %v23, %v29
    %vm33 = vcmask 261120
    %34 = vst.msk [vmem:[#allocation2] sm:$0xff] %vm33, %v31
    %35 = vst.msk [vmem:[#allocation2 + $0x8] sm:$0xff] %vm33, %v32
    // Predicated region
    $region10: #{apply.1} parent=1 // pred_check
      _
    $region11: #{apply.1} parent=1 // pred_check_branch
      %37 = sbr.rel (0) target = $region13
    $region12: #{apply.1} parent=1 // pred_region
      %s39 = ssub.s32 256, 256
      %40 = vsyncadd [#allocation3], %s39
      %s41 = sshll.u32 [#allocation2], 4
      %s42 = int_to_ptr.vmem [resolvable:$true] %s41
      %47 = dma.vmem_to_hbm [thread:$0]  %s42, 256, %s2, [#allocation3], 128, 128, 8
    $region13: #{apply.1} parent=1 // pred_fallthru
      _
    // Predicated region
    $region14: #{apply.1} parent=1 // pred_check
      _
    $region15: #{apply.1} parent=1 // pred_check_branch
      %49 = sbr.rel (0) target = $region17
    $region16: #{apply.1} parent=1 // pred_region
      %50 = dma.done [#allocation3], 256
    $region17: #{apply.1} parent=1 // pred_fallthru
      _
    %51 = vsyncpa [#allocation3], 1

</llo_original>
